<compile_context>
chip_gen: v6e
topology: v6e:2x2x1
jax: 0.10.0
libtpu: 0.0.40
codegen_flags: <defaults>
</compile_context>

<pallas_src>
import functools

import jax
import jax.numpy as jnp
from jax import lax
from jax.experimental import pallas as pl
from jax.experimental.pallas import tpu as pltpu


# ----------------------------------------------------------------------------- helpers
def _cdiv(a, b):
    return -(-a // b)


def _default_vmem_budget():
    """Total bytes for live data blocks (in + out, double-buffered)."""
    cap = 64 * 1024 * 1024                      # conservative: v7x physical VMEM / TC
    try:
        info = pltpu.get_tpu_info()
        cap = int(getattr(info, "vmem_capacity_bytes", cap))
    except Exception:
        pass
    return min(24 * 1024 * 1024, max(cap // 3, 8 * 1024 * 1024))


def _vmem_limit(budget):
    """Explicit scoped-VMEM limit: enough headroom, safe on every generation."""
    return int(max(16 * 1024 * 1024, min(budget + 8 * 1024 * 1024, 32 * 1024 * 1024)))


def _pick_row_tile(n_rows, row_bytes, sub, budget, live_mult, n_parallel):
    """Largest sublane-aligned row tile fitting the budget, but with enough grid
    steps to shard across v7x's two TensorCores and amortize per-step overhead."""
    rt = max(1, budget // (live_mult * row_bytes))
    if rt >= n_rows:
        rt = n_rows
    elif rt >= sub:
        rt = (rt // sub) * sub
    else:
        rt = min(n_rows, sub)                   # slight overshoot, keeps legal tiling
    while (n_parallel * _cdiv(n_rows, rt) < 8
           and rt >= 2 * sub
           and (rt // 2) * row_bytes >= 512 * 1024):
        rt = max(sub, ((rt // 2) // sub) * sub)
    return rt


# ------------------------------------------------------------ standalone span-mask kernel
def _adaptive_span_kernel(ratio_ref, attn_ref, out_ref, *, span, size, ramp_size, packed):
    """Mask-multiply one (batch, rows, width) block for head pl.program_id(0).

    ratio_ref: (nheads,) f32 in SMEM.  packed=True -> width == 128 and each row packs
    128 consecutive elements of the flattened (M, span) slab; the span column is
    rebuilt in-kernel.  packed=False -> width == span (full last dim).
    """
    ratio = ratio_ref[pl.program_id(0)]                       # scalar from SMEM
    rows, width = attn_ref.shape[-2], attn_ref.shape[-1]

    if packed:
        row = lax.broadcasted_iota(jnp.int32, (rows, width), 0) + pl.program_id(1) * rows
        lane = lax.broadcasted_iota(jnp.int32, (rows, width), 1)
        if span & (span - 1) == 0:                            # power-of-two span
            col = ((row * width + lane) & (span - 1)).astype(jnp.float32)
        else:
            # exact (row*width + lane) mod span in f32 with +/-1 quotient correction
            spanf = jnp.float32(span)
            rowf = row.astype(jnp.float32)
            r_m = rowf - jnp.floor(rowf / spanf) * spanf
            r_m = jnp.where(r_m < 0.0, r_m + spanf, r_m)
            r_m = jnp.where(r_m >= spanf, r_m - spanf, r_m)
            t = r_m * jnp.float32(width) + lane.astype(jnp.float32)
            col = t - jnp.floor(t / spanf) * spanf
            col = jnp.where(col < 0.0, col + spanf, col)
            col = jnp.where(col >= spanf, col - spanf, col)
    else:
        col = lax.broadcasted_iota(jnp.int32, (1, width), 1).astype(jnp.float32)

    # narrowed mask_template value at column j is exactly j - (span - 1)
    tmpl = col - jnp.float32(span - 1)
    mask = (tmpl + ratio * jnp.float32(size)) / jnp.float32(ramp_size) + jnp.float32(1.0)
    mask = jnp.clip(mask, 0.0, 1.0)

    x = attn_ref[...].astype(jnp.float32)                     # mask math in f32 (v5e safe)
    out_ref[...] = (x * mask[None]).astype(out_ref.dtype)


def adaptive_span_forward(attn, size_ratio, *, nheads, size, ramp_size,
                          donate=False, row_tile=None, vmem_budget_bytes=None):
    """attn: (B, M, L) with B = batch*nheads; size_ratio: (nheads, 1, 1) or (nheads,)."""
    B, M, L = attn.shape
    assert B % nheads == 0, "attn.shape[0] must be batch * nheads"
    assert L <= size, "adaptive span: attn last dim must not exceed the mask size"
    batch = B // nheads
    dtype = attn.dtype
    itemsize = jnp.dtype(dtype).itemsize
    ratio = jnp.asarray(size_ratio, jnp.float32).reshape(nheads)
    if vmem_budget_bytes is None:
        vmem_budget_bytes = _default_vmem_budget()

    # Lane-dense packing whenever the per-(batch, head) slab is a multiple of 128.
    packed = ((M * L) % 128 == 0
              and (M * L) // 128 < (1 << 24)          # exact-in-f32 guards
              and 128 * L < (1 << 24))
    if packed:
        width, n_rows = 128, (M * L) // 128
    else:
        width, n_rows = L, M                          # full last dim -> always legal

    x = attn.reshape(batch, nheads, n_rows, width)    # free reshape (contiguous slabs)

    sub = 8 * max(1, 4 // itemsize)                   # 8 f32 / 16 bf16 / 32 int8
    row_bytes = batch * width * itemsize
    if row_tile is not None:
        assert row_tile == n_rows or row_tile % 8 == 0
        rt = min(row_tile, n_rows)
    else:
        rt = _pick_row_tile(n_rows, row_bytes, sub, vmem_budget_bytes,
                            live_mult=4, n_parallel=nheads)

    grid = (nheads, pl.cdiv(n_rows, rt))
    data_spec = pl.BlockSpec((batch, None, rt, width), lambda h, r: (0, h, r, 0))

    kernel = functools.partial(_adaptive_span_kernel, span=L, size=size,
                               ramp_size=ramp_size, packed=packed)

    out = pl.pallas_call(
        kernel,
        out_shape=jax.ShapeDtypeStruct(x.shape, dtype),
        grid_spec=pltpu.PrefetchScalarGridSpec(
            num_scalar_prefetch=0,
            grid=grid,
            in_specs=[
                pl.BlockSpec(memory_space=pltpu.MemorySpace.SMEM),   # (nheads,) ratios
                data_spec,
            ],
            out_specs=data_spec),
        compiler_params=pltpu.CompilerParams(
            dimension_semantics=("parallel", "parallel"),
            vmem_limit_bytes=_vmem_limit(vmem_budget_bytes)),
        input_output_aliases={1: 0} if donate else {},
    )(ratio, x)

    return out.reshape(B, M, L)


# ------------------------------------- fused SeqAttention epilogue (softmax+mask+renorm)
def _softmax_adaptive_span_kernel(ratio_ref, scores_ref, out_ref, *, size, ramp_size, scale):
    ratio = ratio_ref[pl.program_id(0)]
    L = scores_ref.shape[-1]

    col = lax.broadcasted_iota(jnp.int32, (1, L), 1).astype(jnp.float32)
    mask = (col - jnp.float32(L - 1) + ratio * jnp.float32(size)) \
        / jnp.float32(ramp_size) + jnp.float32(1.0)
    mask = jnp.clip(mask, 0.0, 1.0)                              # (1, L)

    s = scores_ref[...].astype(jnp.float32) * jnp.float32(scale)  # (batch, tm, L)
    s = s - jnp.max(s, axis=-1, keepdims=True)
    e = jnp.exp(s)
    p = e / jnp.sum(e, axis=-1, keepdims=True)                   # softmax (ref order)
    q = p * mask[None]                                           # adaptive-span mask
    q = q / (jnp.sum(q, axis=-1, keepdims=True) + jnp.float32(1e-8))
    out_ref[...] = q.astype(out_ref.dtype)


def softmax_adaptive_span_forward(scores, size_ratio, *, nheads, size, ramp_size,
                                  scale=None, vmem_budget_bytes=None):
    """Fused: softmax(scores*scale) -> adaptive-span mask -> renormalize (+1e-8).

    Replaces the standalone mask pass inside SeqAttention.forward so the attention
    probabilities never make an extra HBM round trip just for the span mask.
    """
    B, M, L = scores.shape
    assert B % nheads == 0 and L <= size
    batch = B // nheads
    dtype = scores.dtype
    itemsize = jnp.dtype(dtype).itemsize
    ratio = jnp.asarray(size_ratio, jnp.float32).reshape(nheads)
    if vmem_budget_bytes is None:
        vmem_budget_bytes = _default_vmem_budget()

    x = scores.reshape(batch, nheads, M, L)
    sub = 8 * max(1, 4 // itemsize)
    row_bytes = batch * L * itemsize
    # live_mult=8: in/out double-buffered + f32 intermediates of the same block size.
    tm = _pick_row_tile(M, row_bytes, sub, vmem_budget_bytes, live_mult=8, n_parallel=nheads)

    grid = (nheads, pl.cdiv(M, tm))
    spec = pl.BlockSpec((batch, None, tm, L), lambda h, r: (0, h, r, 0))
    kernel = functools.partial(_softmax_adaptive_span_kernel, size=size,
                               ramp_size=ramp_size,
                               scale=1.0 if scale is None else float(scale))

    out = pl.pallas_call(
        kernel,
        out_shape=jax.ShapeDtypeStruct(x.shape, dtype),
        grid_spec=pltpu.PrefetchScalarGridSpec(
            num_scalar_prefetch=0,
            grid=grid,
            in_specs=[pl.BlockSpec(memory_space=pltpu.MemorySpace.SMEM), spec],
            out_specs=spec),
        compiler_params=pltpu.CompilerParams(
            dimension_semantics=("parallel", "parallel"),
            vmem_limit_bytes=_vmem_limit(vmem_budget_bytes)),
    )(ratio, x)
    return out.reshape(B, M, L)


# --------------------------------------------------------------------- pure-JAX references
def adaptive_span_reference(attn, size_ratio, *, nheads, size, ramp_size):
    B, M, L = attn.shape
    batch = B // nheads
    mask_template = jnp.linspace(1.0 - size, 0.0, num=size, dtype=jnp.float32)
    mask = mask_template + jnp.asarray(size_ratio, jnp.float32).reshape(nheads, 1, 1) * size
    mask = jnp.clip(mask / ramp_size + 1.0, 0.0, 1.0)
    if L < size:
        mask = mask[..., size - L:]
    x = attn.reshape(batch, nheads, M, L) * mask
    return x.reshape(B, M, L)


def softmax_adaptive_span_reference(scores, size_ratio, *, nheads, size, ramp_size, scale=None):
    B, M, L = scores.shape
    batch = B // nheads
    s = scores.astype(jnp.float32)
    if scale is not None:
        s = s * scale
    p = jax.nn.softmax(s, axis=-1)
    mask_template = jnp.linspace(1.0 - size, 0.0, num=size, dtype=jnp.float32)
    mask = mask_template + jnp.asarray(size_ratio, jnp.float32).reshape(nheads, 1, 1) * size
    mask = jnp.clip(mask / ramp_size + 1.0, 0.0, 1.0)
    if L < size:
        mask = mask[..., size - L:]
    q = p.reshape(batch, nheads, M, L) * mask
    q = q / (q.sum(-1, keepdims=True) + 1e-8)
    return q.reshape(B, M, L).astype(scores.dtype)


# --------------------------------------------------------------------------------- tests
if __name__ == "__main__":
    k1, k2, k3, k4, k5 = jax.random.split(jax.random.PRNGKey(0), 5)

    # Config 1: power-of-two span, lane-packed path.
    nheads, size, ramp = 4, 64, 16
    batch, M, L = 2, 16, 64
    B = batch * nheads
    attn = jax.random.uniform(k1, (B, M, L), dtype=jnp.float32)
    ratio = (jnp.full((nheads, 1, 1), 0.5, jnp.float32)
             + 0.05 * jnp.arange(nheads, dtype=jnp.float32).reshape(nheads, 1, 1))
    out = jax.block_until_ready(
        adaptive_span_forward(attn, ratio, nheads=nheads, size=size, ramp_size=ramp))
    ref = adaptive_span_reference(attn, ratio, nheads=nheads, size=size, ramp_size=ramp)
    assert out.shape == (B, M, L)
    assert jnp.allclose(out, ref, atol=1e-6, rtol=1e-6), "config 1 mismatch"

    # Config 1b: bf16 I/O (v5e bandwidth path); mask math stays f32 in-kernel.
    out_bf = jax.block_until_ready(
        adaptive_span_forward(attn.astype(jnp.bfloat16), ratio,
                              nheads=nheads, size=size, ramp_size=ramp))
    ref_bf = adaptive_span_reference(attn.astype(jnp.bfloat16), ratio,
                                     nheads=nheads, size=size, ramp_size=ramp)
    assert jnp.allclose(out_bf.astype(jnp.float32), ref_bf.astype(jnp.float32),
                        atol=2e-2, rtol=2e-2), "bf16 config mismatch"

    # Config 1c: donated input -> in-place masking via input_output_aliases={1: 0}.
    donated = jax.jit(
        functools.partial(adaptive_span_forward, nheads=nheads, size=size,
                          ramp_size=ramp, donate=True),
        donate_argnums=(0,))
    out_d = jax.block_until_ready(donated(attn + 0.0, ratio))
    assert jnp.allclose(out_d, ref, atol=1e-6, rtol=1e-6), "donated config mismatch"

    # Config 2: non-power-of-two span, (M*L) % 128 == 0 -> lane-packed general path.
    nh2, size2, ramp2 = 2, 96, 8
    b2, M2, L2 = 2, 8, 80
    attn2 = jax.random.uniform(k2, (b2 * nh2, M2, L2), dtype=jnp.float32)
    ratio2 = (jnp.full((nh2, 1, 1), 0.25, jnp.float32)
              + 0.1 * jnp.arange(nh2, dtype=jnp.float32).reshape(nh2, 1, 1))
    out2 = jax.block_until_ready(
        adaptive_span_forward(attn2, ratio2, nheads=nh2, size=size2, ramp_size=ramp2))
    ref2 = adaptive_span_reference(attn2, ratio2, nheads=nh2, size=size2, ramp_size=ramp2)
    assert jnp.allclose(out2, ref2, atol=1e-6, rtol=1e-6), "config 2 mismatch"

    # Config 3: fallback path ((M*L) % 128 != 0) -> width = L, masked stores.
    b3, M3, L3 = 2, 3, 80
    attn3 = jax.random.uniform(k3, (b3 * nh2, M3, L3), dtype=jnp.float32)
    out3 = jax.block_until_ready(
        adaptive_span_forward(attn3, ratio2, nheads=nh2, size=size2, ramp_size=ramp2))
    ref3 = adaptive_span_reference(attn3, ratio2, nheads=nh2, size=size2, ramp_size=ramp2)
    assert jnp.allclose(out3, ref3, atol=1e-6, rtol=1e-6), "config 3 mismatch"

    # Config 4: partial trailing row tile (n_rows=10, row_tile=8 -> edge block of 2).
    M4, L4 = 20, 64
    attn4 = jax.random.uniform(k4, (B, M4, L4), dtype=jnp.float32)
    out4 = jax.block_until_ready(
        adaptive_span_forward(attn4, ratio, nheads=nheads, size=size, ramp_size=ramp,
                              row_tile=8))
    ref4 = adaptive_span_reference(attn4, ratio, nheads=nheads, size=size, ramp_size=ramp)
    assert jnp.allclose(out4, ref4, atol=1e-6, rtol=1e-6), "partial-tile config mismatch"

    # Config 5: fused softmax + span mask + renormalize epilogue (SeqAttention hot path).
    head_dim = 32
    scores = jax.random.normal(k5, (B, M, L), dtype=jnp.float32)
    scale = 1.0 / (float(head_dim) ** 0.5)
    out5 = jax.block_until_ready(
        softmax_adaptive_span_forward(scores, ratio, nheads=nheads, size=size,
                                      ramp_size=ramp, scale=scale))
    ref5 = softmax_adaptive_span_reference(scores, ratio, nheads=nheads, size=size,
                                           ramp_size=ramp, scale=scale)
    assert jnp.allclose(out5, ref5, atol=1e-5, rtol=1e-5), "fused config mismatch"

    # TODO(synk): full fusion with the attention matmuls / skew / unskew and the
    # StaircaseModel / TransformerMod staircase orchestration (caching, embeddings,
    # output projection, trim_memory/get_loss/param_clamp) are host-side or belong
    # to the surrounding attention kernel; not implemented here.
    print("KERNEL_OK")
</pallas_src>

<mosaic_0001>
module attributes {stable_mosaic.version = 11 : i64} {
  func.func @_adaptive_span_kernel(%arg0: i32, %arg1: i32, %arg2: memref<4xf32, #tpu.memory_space<smem>>, %arg3: memref<2x1x8x128xf32, #tpu.memory_space<vmem>>, %arg4: memref<2x1x8x128xf32, #tpu.memory_space<vmem>>) attributes {dimension_semantics = [#tpu.dimension_semantics<parallel>, #tpu.dimension_semantics<parallel>], iteration_bounds = array<i64: 4, 1>, scalar_prefetch = 0 : i64, scratch_operands = 0 : i64, tpu.core_type = #tpu.core_type<tc>, window_params = [{transform_indices = @transform_0, window_bounds = array<i64: 4>}, {transform_indices = @transform_1, window_bounds = array<i64: 2, 1, 8, 128>}, {transform_indices = @transform_2, window_bounds = array<i64: 2, 1, 8, 128>}]} {
    %0 = arith.index_cast %arg0 : i32 to index
    %1 = memref.load %arg2[%0] : memref<4xf32, #tpu.memory_space<smem>>
    %2 = tpu.iota {dimensions = array<i32: 0>} : vector<8x128xi32>
    %c8_i32 = arith.constant 8 : i32
    %3 = arith.muli %arg1, %c8_i32 : i32
    %4 = vector.broadcast %3 : i32 to vector<8x128xi32>
    %5 = arith.addi %2, %4 : vector<8x128xi32>
    %6 = tpu.iota {dimensions = array<i32: 1>} : vector<8x128xi32>
    %c128_i32 = arith.constant 128 : i32
    %7 = vector.broadcast %c128_i32 : i32 to vector<8x128xi32>
    %8 = arith.muli %5, %7 : vector<8x128xi32>
    %9 = arith.addi %8, %6 : vector<8x128xi32>
    %c63_i32 = arith.constant 63 : i32
    %10 = vector.broadcast %c63_i32 : i32 to vector<8x128xi32>
    %11 = arith.andi %9, %10 : vector<8x128xi32>
    %12 = arith.sitofp %11 : vector<8x128xi32> to vector<8x128xf32>
    %cst = arith.constant 6.300000e+01 : f32
    %13 = vector.broadcast %cst : f32 to vector<8x128xf32>
    %14 = arith.subf %12, %13 : vector<8x128xf32>
    %cst_0 = arith.constant 6.400000e+01 : f32
    %15 = arith.mulf %1, %cst_0 : f32
    %16 = vector.broadcast %15 : f32 to vector<8x128xf32>
    %17 = arith.addf %14, %16 : vector<8x128xf32>
    %cst_1 = arith.constant 1.600000e+01 : f32
    %18 = vector.broadcast %cst_1 : f32 to vector<8x128xf32>
    %19 = arith.divf %17, %18 : vector<8x128xf32>
    %cst_2 = arith.constant 1.000000e+00 : f32
    %20 = vector.broadcast %cst_2 : f32 to vector<8x128xf32>
    %21 = arith.addf %19, %20 : vector<8x128xf32>
    %cst_3 = arith.constant 0.000000e+00 : f32
    %cst_4 = arith.constant 1.000000e+00 : f32
    %22 = vector.broadcast %cst_3 : f32 to vector<8x128xf32>
    %23 = arith.maximumf %22, %21 : vector<8x128xf32>
    %24 = vector.broadcast %cst_4 : f32 to vector<8x128xf32>
    %25 = arith.minimumf %24, %23 : vector<8x128xf32>
    %c0 = arith.constant 0 : index
    %c0_5 = arith.constant 0 : index
    %c0_6 = arith.constant 0 : index
    %c0_7 = arith.constant 0 : index
    %26 = vector.load %arg3[%c0, %c0_5, %c0_6, %c0_7] : memref<2x1x8x128xf32, #tpu.memory_space<vmem>>, vector<2x1x8x128xf32>
    %27 = vector.shape_cast %26 : vector<2x1x8x128xf32> to vector<2x8x128xf32>
    %28 = vector.shape_cast %25 : vector<8x128xf32> to vector<1x8x128xf32>
    %29 = vector.broadcast %28 : vector<1x8x128xf32> to vector<2x8x128xf32>
    %30 = arith.mulf %27, %29 : vector<2x8x128xf32>
    %c0_8 = arith.constant 0 : index
    %c0_9 = arith.constant 0 : index
    %c0_10 = arith.constant 0 : index
    %c0_11 = arith.constant 0 : index
    %31 = vector.load %arg4[%c0_8, %c0_9, %c0_10, %c0_11] : memref<2x1x8x128xf32, #tpu.memory_space<vmem>>, vector<2x1x8x128xf32>
    %32 = vector.shape_cast %31 : vector<2x1x8x128xf32> to vector<2x8x128xf32>
    %33 = vector.shape_cast %30 : vector<2x8x128xf32> to vector<2x1x8x128xf32>
    tpu.vector_store %arg4[%c0_8, %c0_9, %c0_10, %c0_11], %33 {strides = array<i32>} : memref<2x1x8x128xf32, #tpu.memory_space<vmem>>, vector<2x1x8x128xf32>,
    return
  }
  func.func @transform_0(%arg0: i32, %arg1: i32) -> i32 {
    %c0_i32 = arith.constant 0 : i32
    %c0_i32_0 = arith.constant 0 : i32
    return %c0_i32 : i32
  }
  func.func @transform_1(%arg0: i32, %arg1: i32) -> (i32, i32, i32, i32) {
    %c0_i32 = arith.constant 0 : i32
    %c0_i32_0 = arith.constant 0 : i32
    %c0_i32_1 = arith.constant 0 : i32
    return %c0_i32, %arg0, %arg1, %c0_i32_0 : i32, i32, i32, i32
  }
  func.func @transform_2(%arg0: i32, %arg1: i32) -> (i32, i32, i32, i32) {
    %c0_i32 = arith.constant 0 : i32
    %c0_i32_0 = arith.constant 0 : i32
    %c0_i32_1 = arith.constant 0 : i32
    return %c0_i32, %arg0, %arg1, %c0_i32_0 : i32, i32, i32, i32
  }
}

</mosaic_0001>

<llo_original>
// kernel: tpu_custom_call.1
$region0: #{tpu_custom_call.1}
  #allocation0 [shape = 'u32[]', space=smem, size = 0x4, offset = 0x4, fixed_abs, tag = 'smem constant byte address 0x4 - core index']
  #allocation1 [shape = 'u32[144,128]{1,0:T(1,128)}', space=vmem, size = 0x12000, scoped, tag = 'internal scratch']
  %s0 = inlined_call_operand.hbm [shape: f32[4], index: 0, kind: input, shape index: {}]
  %s1 = inlined_call_operand.hbm [shape: f32[2,4,8,128], index: 1, kind: input, shape index: {}]
  %s2 = inlined_call_operand.hbm [shape: f32[2,4,8,128], index: 2, kind: output, shape index: {}]
  %s3 = sld [smem:[#allocation0]]
  $region49: #{tpu_custom_call.1} parent=0
    _
  %s5 = ssub.s32 1, %s3
  %s6 = scalar_select 0, %s5, %s3
  $region1: #{tpu_custom_call.1} parent=0
    #allocation2 [shape = 'u8[512]{0}', space=smem, size = 0x200, scoped, tag = 'input window, operand 0, single buffered']
    #allocation3 [shape = 's32[2]{0}', space=sflag, size = 0x8, scoped, tag = 'scoped memory for tpu_custom_call.1']
    #allocation4 [shape = 's32[2]{0}', space=sflag, size = 0x8, scoped, tag = 'scoped memory for tpu_custom_call.1']
    #allocation5 [shape = 's32[2]{0}', space=sflag, size = 0x8, scoped, tag = 'scoped memory for tpu_custom_call.1']
    #allocation6 [shape = 'u8[16384]{0}', space=vmem, size = 0x4000, scoped, tag = 'input window, operand 1']
    #allocation7 [shape = 'u8[16384]{0}', space=vmem, size = 0x4000, scoped, tag = 'output window, operand 0']
    %7 = vsyncpa [#allocation5], 0
    %8 = vsyncpa [#allocation3], 0
    %s9 = scalar_lea.sflag [#allocation3], 1
    %10 = vsyncpa %s9, 0
    %11 = vsyncpa [#allocation4], 0
    %s12 = scalar_lea.sflag [#allocation4], 1
    %13 = vsyncpa %s12, 0
    loop: start=0, step=1, limit=6
    $region2: #{tpu_custom_call.1} parent=1 // loop_pre_header
      _
    $region3: #{tpu_custom_call.1} parent=1 // loop_header
      %s15 = sphi 0, %s19
      %p16 = scmp.ge.s32.totalorder %s15, 6
      %s22 = sphi 0, %s34
      %s23 = sphi 0, %s30
      %s24 = sphi 0, %s22
      %s25 = sphi 0, %s23
      %s26 = sphi 0, %s24
      %s27 = sphi 0, %s25
      %s35 = sphi 0, %s35
      %s37 = sphi 0, %s35
      %s38 = sphi 0, %s37
      %s52 = sphi 0, %s38
      %s60 = sphi 0, %s62
      %s63 = sphi 0, %s60
      %s64 = sphi 0, %s63
      %s80 = sphi 0, %s64
      %s88 = sphi 0, %s90
      %s91 = sphi 0, %s88
      %s92 = sphi 0, %s91
      %s108 = sphi 0, %s92
    $region4: #{tpu_custom_call.1} parent=1 // loop_header_branch
      %18 = sbr.rel (%p16) target = $region8
    $region5: #{tpu_custom_call.1} parent=1 // loop_body
      %s20 = ssub.s32 %s15, 1
      %s21 = ssub.s32 %s15, 2
      %s28 = sadd.s32 1, %s23
      %p29 = scmp.ge.s32.totalorder %s28, 1
      %s30 = scalar_select %p29, 0, %s28
      %s31 = sadd.s32 1, %s22
      %s32 = scalar_select %p29, %s31, %s22
      %p33 = scmp.ge.s32.totalorder %s32, 4
      %s34 = scalar_select %p33, 0, %s32
      %s36 = sadd.s32 %s35, 1
      %p39 = scmp.eq.s32.totalorder %s15, 3
      %p40 = scmp.ne.s32.totalorder %s35, %s37
      %p41 = scmp.eq.s32.totalorder %s15, 0
      %p42 = por %p40, %p41
      %p43 = scmp.ne.s32.totalorder %s35, %s37
      %p44 = scmp.eq.s32.totalorder %s20, 3
      %p45 = por %p43, %p44
      %p46 = scmp.ne.s32.totalorder %s37, %s38
      %p47 = scmp.eq.s32.totalorder %s20, 0
      %p48 = por %p46, %p47
      %p49 = scmp.ne.s32.totalorder %s37, %s38
      %p50 = scmp.eq.s32.totalorder %s21, 3
      %p51 = por %p49, %p50
      %p53 = scmp.ne.s32.totalorder %s38, %s52
      %p54 = scmp.eq.s32.totalorder %s21, 0
      %p55 = por %p53, %p54
      %s56 = ssub.s32 %s22, %s34
      %s57 = ssub.s32 %s23, %s30
      %s58 = sor.u32 %s56, %s57
      %p59 = scmp.eq.s32.totalorder %s58, 0
      %s61 = sadd.s32 %s60, 1
      %s62 = scalar_select %p59, %s60, %s61
      %p65 = pneg %p59
      %p66 = scmp.eq.s32.totalorder %s15, 3
      %p67 = por %p65, %p66
      %p68 = scmp.ne.s32.totalorder %s60, %s63
      %p69 = scmp.eq.s32.totalorder %s15, 0
      %p70 = por %p68, %p69
      %p71 = scmp.ne.s32.totalorder %s60, %s63
      %p72 = scmp.eq.s32.totalorder %s20, 3
      %p73 = por %p71, %p72
      %p74 = scmp.ne.s32.totalorder %s63, %s64
      %p75 = scmp.eq.s32.totalorder %s20, 0
      %p76 = por %p74, %p75
      %p77 = scmp.ne.s32.totalorder %s63, %s64
      %p78 = scmp.eq.s32.totalorder %s21, 3
      %p79 = por %p77, %p78
      %p81 = scmp.ne.s32.totalorder %s64, %s80
      %p82 = scmp.eq.s32.totalorder %s21, 0
      %p83 = por %p81, %p82
      %s84 = ssub.s32 %s22, %s34
      %s85 = ssub.s32 %s23, %s30
      %s86 = sor.u32 %s84, %s85
      %p87 = scmp.eq.s32.totalorder %s86, 0
      %s89 = sadd.s32 %s88, 1
      %s90 = scalar_select %p87, %s88, %s89
      %p93 = pneg %p87
      %p94 = scmp.eq.s32.totalorder %s15, 3
      %p95 = por %p93, %p94
      %p96 = scmp.ne.s32.totalorder %s88, %s91
      %p97 = scmp.eq.s32.totalorder %s15, 0
      %p98 = por %p96, %p97
      %p99 = scmp.ne.s32.totalorder %s88, %s91
      %p100 = scmp.eq.s32.totalorder %s20, 3
      %p101 = por %p99, %p100
      %p102 = scmp.ne.s32.totalorder %s91, %s92
      %p103 = scmp.eq.s32.totalorder %s20, 0
      %p104 = por %p102, %p103
      %p105 = scmp.ne.s32.totalorder %s91, %s92
      %p106 = scmp.eq.s32.totalorder %s21, 3
      %p107 = por %p105, %p106
      %p109 = scmp.ne.s32.totalorder %s92, %s108
      %p110 = scmp.eq.s32.totalorder %s21, 0
      %p111 = por %p109, %p110
      %p112 = scmp.le.s32.totalorder 1, %s15
      %p113 = scmp.lt.s32.totalorder %s15, 5
      %p114 = pnand %p112, %p113
      %p115 = pneg %p114
      // Predicated region
      $region9: #{tpu_custom_call.1} parent=5 // pred_check
        _
      $region10: #{tpu_custom_call.1} parent=5 // pred_check_branch
        %117 = sbr.rel (%p114) target = $region12
      $region11: #{tpu_custom_call.1} parent=5 // pred_region
        %s118 = ssub.s32 %s15, 1
        // Predicated region
        $region13: #{tpu_custom_call.1} parent=11 // pred_check
          %p119 = pneg %p48
        $region14: #{tpu_custom_call.1} parent=11 // pred_check_branch
          %121 = sbr.rel (%p119) target = $region16
        $region15: #{tpu_custom_call.1} parent=11 // pred_region
          %s123 = ssub.s32 16, 16
          %124 = vsyncadd [#allocation5], %s123
          %127 = dma.hbm_to_smem %s0, 16, [#allocation2], [#allocation5]
        $region16: #{tpu_custom_call.1} parent=11 // pred_fallthru
          _
      $region12: #{tpu_custom_call.1} parent=5 // pred_fallthru
        _
      %p128 = scmp.lt.s32.totalorder %s15, 4
      // Predicated region
      $region17: #{tpu_custom_call.1} parent=5 // pred_check
        %p129 = pneg %p128
      $region18: #{tpu_custom_call.1} parent=5 // pred_check_branch
        %131 = sbr.rel (%p129) target = $region20
      $region19: #{tpu_custom_call.1} parent=5 // pred_region
        // Predicated region
        $region21: #{tpu_custom_call.1} parent=19 // pred_check
          %p132 = pneg %p70
        $region22: #{tpu_custom_call.1} parent=19 // pred_check_branch
          %134 = sbr.rel (%p132) target = $region24
        $region23: #{tpu_custom_call.1} parent=19 // pred_region
          %s135 = sand.u32 %s60, 1
          %s136 = scalar_lea.sflag [#allocation3], %s135
          %s137 = sand.u32 %s60, 1
          %s138 = smul.addr %s137, 16
          %s139 = scalar_lea.vmem [#allocation6], %s138
          %s141 = ssub.s32 256, 256
          %142 = vsyncadd %s136, %s141
          %s143 = sadd.s32 %s23, %s22
          %s144 = smul.addr %s143, 128
          %s145 = scalar_lea.hbm %s1, %s144
          %s146 = sshll.u32 %s139, 4
          %s147 = int_to_ptr.vmem [resolvable:$true] %s146
          %152 = dma.hbm_to_vmem [thread:$0]  %s145, 256, %s147, %s136, 512, 128, 8
        $region24: #{tpu_custom_call.1} parent=19 // pred_fallthru
          _
      $region20: #{tpu_custom_call.1} parent=5 // pred_fallthru
        _
      %p153 = scmp.le.s32.totalorder 1, %s15
      %p154 = scmp.lt.s32.totalorder %s15, 5
      %p155 = pnand %p153, %p154
      %p156 = pneg %p155
      // Predicated region
      $region25: #{tpu_custom_call.1} parent=5 // pred_check
        _
      $region26: #{tpu_custom_call.1} parent=5 // pred_check_branch
        %158 = sbr.rel (%p155) target = $region28
      $region27: #{tpu_custom_call.1} parent=5 // pred_region
        %s159 = ssub.s32 %s15, 1
        // Predicated region
        $region29: #{tpu_custom_call.1} parent=27 // pred_check
          %p160 = pneg %p48
        $region30: #{tpu_custom_call.1} parent=27 // pred_check_branch
          %162 = sbr.rel (%p160) target = $region32
        $region31: #{tpu_custom_call.1} parent=27 // pred_region
          %163 = dma.done [#allocation5], 16
        $region32: #{tpu_custom_call.1} parent=27 // pred_fallthru
          _
        %s164 = sand.u32 %s63, 1
        %s165 = scalar_lea.sflag [#allocation3], %s164
        %s166 = sand.u32 %s63, 1
        %s167 = smul.addr %s166, 16
        %s168 = scalar_lea.vmem [#allocation6], %s167
        // Predicated region
        $region33: #{tpu_custom_call.1} parent=27 // pred_check
          %p169 = pneg %p76
        $region34: #{tpu_custom_call.1} parent=27 // pred_check_branch
          %171 = sbr.rel (%p169) target = $region36
        $region35: #{tpu_custom_call.1} parent=27 // pred_region
          %172 = dma.done %s165, 256
        $region36: #{tpu_custom_call.1} parent=27 // pred_fallthru
          _
        %173 = sfence
        %p174 = pneg %p48
        %p175 = pneg %p45
        %s176 = sand.u32 %s63, 1
        %s177 = scalar_lea.sflag [#allocation3], %s176
        %s178 = sand.u32 %s63, 1
        %s179 = smul.addr %s178, 16
        %s180 = scalar_lea.vmem [#allocation6], %s179
        %p181 = pneg %p76
        %p182 = pneg %p73
        %p183 = pneg %p104
        %p184 = pneg %p101
        %s185 = sand.u32 %s91, 1
        %s186 = scalar_lea.sflag [#allocation4], %s185
        %s187 = sand.u32 %s91, 1
        %s188 = smul.addr %s187, 16
        %s189 = scalar_lea.vmem [#allocation7], %s188
        %s190 = sld [smem:[#allocation2 + %s24]]
        %v191 = vlaneseq
        %v192 = vshrl.u32 %v191, 7
        %s193 = smul.u32 %s25, 8
        %v194 = vstv %s193
        %v195 = vadd.s32 %v192, %v194
        %v196 = vlaneseq
        %v197 = vand.u32 %v196, 127
        %v198 = vmul.u32 %v195, 128
        %v199 = vadd.s32 %v198, %v197
        %v200 = vand.u32 %v199, 63
        %v201 = vcvt.s32.f32 %v200
        %v202 = vsub.f32 %v201, 63.0
        %s203 = smul.f32 %s190, 64.0
        %v204 = vstv %s203
        %v205 = vadd.f32 %v202, %v204
        %v206 = vrcp.pop 16.0
        %v207 = vmul.f32 %v205, %v206
        %v208 = vadd.f32 %v207, 1.0
        %v209 = vmax.f32 %v208, 0.0
        %v210 = vmin.f32 %v209, 1.0
        %v211 = vld [vmem:[%s168] sm:$0xff]
        %v212 = vld [vmem:[%s168 + $0x8] sm:$0xff]
        %v213 = vmul.f32 %v211, %v210
        %v214 = vmul.f32 %v212, %v210
        %215 = vst [vmem:[%s189] sm:$0xff] %v213
        %216 = vst [vmem:[%s189 + $0x8] sm:$0xff] %v214
        %s217 = sand.u32 %s91, 1
        %s218 = scalar_lea.sflag [#allocation4], %s217
        %s219 = sand.u32 %s91, 1
        %s220 = smul.addr %s219, 16
        %s221 = scalar_lea.vmem [#allocation7], %s220
        // Predicated region
        $region37: #{tpu_custom_call.1} parent=27 // pred_check
          %p222 = pneg %p101
        $region38: #{tpu_custom_call.1} parent=27 // pred_check_branch
          %224 = sbr.rel (%p222) target = $region40
        $region39: #{tpu_custom_call.1} parent=27 // pred_region
          %s226 = ssub.s32 256, 256
          %227 = vsyncadd %s218, %s226
          %s228 = sadd.s32 %s25, %s24
          %s229 = smul.addr %s228, 128
          %s230 = scalar_lea.hbm %s2, %s229
          %s231 = sshll.u32 %s221, 4
          %s232 = int_to_ptr.vmem [resolvable:$true] %s231
          %237 = dma.vmem_to_hbm [thread:$0]  %s232, 256, %s230, %s218, 128, 512, 8
        $region40: #{tpu_custom_call.1} parent=27 // pred_fallthru
          _
      $region28: #{tpu_custom_call.1} parent=5 // pred_fallthru
        _
      %p238 = scmp.le.s32.totalorder 2, %s15
      // Predicated region
      $region41: #{tpu_custom_call.1} parent=5 // pred_check
        %p239 = pneg %p238
      $region42: #{tpu_custom_call.1} parent=5 // pred_check_branch
        %241 = sbr.rel (%p239) target = $region44
      $region43: #{tpu_custom_call.1} parent=5 // pred_region
        %s242 = ssub.s32 %s15, 2
        // Predicated region
        $region45: #{tpu_custom_call.1} parent=43 // pred_check
          %p243 = pneg %p107
        $region46: #{tpu_custom_call.1} parent=43 // pred_check_branch
          %245 = sbr.rel (%p243) target = $region48
        $region47: #{tpu_custom_call.1} parent=43 // pred_region
          %s246 = sand.u32 %s92, 1
          %s247 = scalar_lea.sflag [#allocation4], %s246
          %s248 = sand.u32 %s92, 1
          %s249 = smul.addr %s248, 16
          %s250 = scalar_lea.vmem [#allocation7], %s249
          %251 = dma.done %s247, 256
        $region48: #{tpu_custom_call.1} parent=43 // pred_fallthru
          _
      $region44: #{tpu_custom_call.1} parent=5 // pred_fallthru
        _
    $region6: #{tpu_custom_call.1} parent=1 // loop_footer
      %s19 = sadd.s32 1, %s15
    $region7: #{tpu_custom_call.1} parent=1 // loop_footer_branch
      %14 = sbr.rel target = $region3
    $region8: #{tpu_custom_call.1} parent=1 // loop_exit
      _
    %252 = vsyncpa [#allocation3], 1
    %s253 = scalar_lea.sflag [#allocation3], 1
    %254 = vsyncpa %s253, 1
    %255 = vsyncpa [#allocation4], 1
    %s256 = scalar_lea.sflag [#allocation4], 1
    %257 = vsyncpa %s256, 1
    %258 = vsyncpa [#allocation5], 1
    %s259 = scalar_lea.sflag [#allocation5], 1
    %260 = vsyncpa %s259, 1

</llo_original>
